<compile_context>
chip_gen: v5e
topology: v5e:2x2
jax: 0.10.0
libtpu: 0.0.40
codegen_flags: <defaults>
</compile_context>

<pallas_src>
import functools
import math

import jax
import jax.numpy as jnp
from jax import lax
from jax.experimental import pallas as pl
from jax.experimental.pallas import tpu as pltpu


def _round_up(a, b):
    return (a + b - 1) // b * b


def _device_budget():
    """(pipelined-buffer byte budget, is_v7x) for the current backend."""
    kind = ""
    try:
        kind = jax.devices()[0].device_kind.lower()
    except Exception:  # no device / unusual backend: fall through to default
        pass
    if ("v7" in kind) or ("7x" in kind):
        return 28 * 1024 * 1024, True      # 64 MiB physical VMEM on v7x
    if "v6" in kind:
        return 20 * 1024 * 1024, False     # well under 32 MiB scoped default
    # v5e and unknown chips: stay under the 16 MiB scoped-VMEM default.
    return 12 * 1024 * 1024, False


def _choose_tm(rows_eff, d_eff, itemsize, budget_bytes, min_steps=1):
    """Largest sublane-aligned row tile whose double-buffered in+out tiles fit
    in `budget_bytes` (the only binding constraint for this streaming kernel).
    """
    per_row = 4 * d_eff * itemsize          # 2x in-tile + 2x out-tile per row
    tm = max(1, budget_bytes // per_row)
    if itemsize >= 4:
        align = 8
    elif itemsize == 2:
        align = 16
    else:
        align = 32
    tm = min(tm, _round_up(rows_eff, align))
    tm = max(align, (tm // align) * align)
    # v7x: keep the grid long enough that both TensorCores get work and the
    # pipeline actually overlaps; halve the tile until >= min_steps steps.
    while min_steps > 1 and tm > align and (rows_eff + tm - 1) // tm < min_steps:
        tm = max(align, ((tm // 2) // align) * align)
    return int(tm)


def _choose_packing(D):
    """Smallest n_seg with (n_seg * D) % 128 == 0, or 1 if packing is too wide."""
    if D % 128 == 0:
        return 1
    n_seg = 128 // math.gcd(D, 128)
    if n_seg * D <= 1024 and n_seg <= 32:
        return n_seg
    return 1   # fallback: masked stores, but avoids huge segment matmuls


# ----------------------------- kernels ------------------------------------ #

def _ln_kernel_plain(x_ref, g_ref, b_ref, o_ref, *, eps, d_inner):
    """Standard path: each row of x_ref is one LayerNorm row of width d_inner."""
    x = x_ref[...].astype(jnp.float32)          # (tm, D)
    g = g_ref[...]                              # (1, D) f32
    b = b_ref[...]
    inv_d = jnp.float32(1.0 / d_inner)
    mean = jnp.sum(x, axis=-1, keepdims=True) * inv_d
    xc = x - mean
    var = jnp.sum(xc * xc, axis=-1, keepdims=True) * inv_d
    inv = lax.rsqrt(var + jnp.float32(eps))
    o_ref[...] = (xc * inv * g + b).astype(o_ref.dtype)


def _ln_kernel_packed(x_ref, g_ref, b_ref, s_ref, st_ref, o_ref, *, eps, d_inner):
    """Lane-dense path: each row packs n_seg logical rows of width d_inner.

    s_ref:  (d_eff, n_seg) 0/1 segment-membership (resident).
    st_ref: (n_seg, d_eff) its transpose (resident).
    Per-segment sums / broadcast-backs run on the MXU (free slot here); the
    0/1 matrices with HIGHEST precision keep the broadcast-back exact.
    """
    x = x_ref[...].astype(jnp.float32)          # (tm, d_eff)
    g = g_ref[...]                              # (1, d_eff) f32
    b = b_ref[...]
    S = s_ref[...]
    S_T = st_ref[...]
    inv_d = jnp.float32(1.0 / d_inner)
    hi = lax.Precision.HIGHEST

    s1 = jnp.dot(x, S, preferred_element_type=jnp.float32, precision=hi)
    mean = s1 * inv_d                                            # (tm, n_seg)
    mean_f = jnp.dot(mean, S_T, preferred_element_type=jnp.float32,
                     precision=hi)                               # (tm, d_eff)
    xc = x - mean_f
    s2 = jnp.dot(xc * xc, S, preferred_element_type=jnp.float32, precision=hi)
    inv = lax.rsqrt(s2 * inv_d + jnp.float32(eps))               # (tm, n_seg)
    inv_f = jnp.dot(inv, S_T, preferred_element_type=jnp.float32,
                    precision=hi)                                # (tm, d_eff)
    o_ref[...] = (xc * inv_f * g + b).astype(o_ref.dtype)


# ----------------------------- wrapper ------------------------------------ #

def layer_norm_4dcf(x, gamma, beta, *, eps=1e-5, tm=None):
    """x: (B, T, D) with D = Q*C.  gamma, beta: (D,).  Returns (B, T, D)."""
    B, T, D = x.shape
    rows = B * T

    n_seg = _choose_packing(D)
    d_eff = n_seg * D

    x2 = x.reshape(rows, D)
    rows_p = _round_up(rows, n_seg)
    if rows_p != rows:
        # Tiny pad (< n_seg rows) so rows fold evenly into packed lane rows.
        x2 = jnp.pad(x2, ((0, rows_p - rows), (0, 0)))
    rows_eff = rows_p // n_seg
    if n_seg > 1:
        x2 = x2.reshape(rows_eff, d_eff)

    itemsize = jnp.dtype(x.dtype).itemsize
    budget, is_v7x = _device_budget()
    if tm is None:
        tm = _choose_tm(rows_eff, d_eff, itemsize, budget,
                        min_steps=4 if is_v7x else 1)

    grid = (pl.cdiv(rows_eff, tm),)

    # gamma/beta tiled once per packed segment -> (1, d_eff), kept resident.
    g2 = jnp.tile(gamma.astype(jnp.float32).reshape(1, D), (1, n_seg))
    b2 = jnp.tile(beta.astype(jnp.float32).reshape(1, D), (1, n_seg))

    tile_bytes = tm * d_eff * itemsize
    vmem_needed = 4 * tile_bytes + (4 << 20)          # 2x(in+out) + headroom
    compiler_params = pltpu.CompilerParams(
        dimension_semantics=("parallel",),            # shards across TCs (v7x)
        vmem_limit_bytes=int(max(vmem_needed, 16 << 20)),
    )

    x_spec = pl.BlockSpec((tm, d_eff), lambda i: (i, 0))
    g_spec = pl.BlockSpec((1, d_eff), lambda i: (0, 0))
    out_spec = pl.BlockSpec((tm, d_eff), lambda i: (i, 0))
    out_shape = jax.ShapeDtypeStruct((rows_eff, d_eff), x.dtype)

    if n_seg == 1:
        kernel = functools.partial(_ln_kernel_plain, eps=eps, d_inner=D)
        out2 = pl.pallas_call(
            kernel,
            out_shape=out_shape,
            grid=grid,
            in_specs=[x_spec, g_spec, g_spec],
            out_specs=out_spec,
            compiler_params=compiler_params,
        )(x2, g2, b2)
    else:
        # Segment-membership matrices built once on host (tiny, resident).
        seg_of_lane = jnp.arange(d_eff, dtype=jnp.int32) // D
        S = (seg_of_lane[:, None]
             == jnp.arange(n_seg, dtype=jnp.int32)[None, :]).astype(jnp.float32)
        S_T = S.T
        kernel = functools.partial(_ln_kernel_packed, eps=eps, d_inner=D)
        out2 = pl.pallas_call(
            kernel,
            out_shape=out_shape,
            grid=grid,
            in_specs=[
                x_spec,
                g_spec,
                g_spec,
                pl.BlockSpec((d_eff, n_seg), lambda i: (0, 0)),   # S (resident)
                pl.BlockSpec((n_seg, d_eff), lambda i: (0, 0)),   # S_T (resident)
            ],
            out_specs=out_spec,
            compiler_params=compiler_params,
        )(x2, g2, b2, S, S_T)

    out = out2.reshape(rows_p, D)
    if rows_p != rows:
        out = out[:rows]
    return out.reshape(B, T, D)


def layer_norm_ref(x, gamma, beta, eps=1e-5):
    xf = x.astype(jnp.float32)
    mean = jnp.mean(xf, axis=-1, keepdims=True)
    var = jnp.mean((xf - mean) ** 2, axis=-1, keepdims=True)
    y = (xf - mean) * lax.rsqrt(var + eps)
    return (y * gamma + beta).astype(x.dtype)


if __name__ == "__main__":
    eps = 1e-5
    key = jax.random.PRNGKey(0)

    # --- Case 1: module config D = Q*C = 32 (lane-dense packed path) ---
    Q, C = 4, 8
    D = Q * C
    B, T = 2, 8
    k1, k2, k3, key = jax.random.split(key, 4)
    x = jax.random.normal(k1, (B, T, D), dtype=jnp.float32)
    gamma = jax.random.normal(k2, (D,), dtype=jnp.float32) * 0.1 + 1.0
    beta = jax.random.normal(k3, (D,), dtype=jnp.float32) * 0.1

    out = jax.block_until_ready(layer_norm_4dcf(x, gamma, beta, eps=eps))
    ref = layer_norm_ref(x, gamma, beta, eps=eps)
    assert out.shape == (B, T, D)
    assert jnp.allclose(out, ref, atol=3e-5, rtol=3e-5), "mismatch (packed)"

    # --- Case 2: D = 128 (plain path), rows not a tile multiple -> masked
    #     last partial block, no host-side padding/copies. ---
    Q2, C2 = 8, 16
    D2 = Q2 * C2
    B2, T2 = 2, 11
    k4, k5, k6, key = jax.random.split(key, 4)
    x2 = jax.random.normal(k4, (B2, T2, D2), dtype=jnp.float32)
    gamma2 = jax.random.normal(k5, (D2,), dtype=jnp.float32) * 0.1 + 1.0
    beta2 = jax.random.normal(k6, (D2,), dtype=jnp.float32) * 0.1

    out2 = jax.block_until_ready(layer_norm_4dcf(x2, gamma2, beta2, eps=eps))
    ref2 = layer_norm_ref(x2, gamma2, beta2, eps=eps)
    assert out2.shape == (B2, T2, D2)
    assert jnp.allclose(out2, ref2, atol=3e-5, rtol=3e-5), "mismatch (plain)"

    # --- Case 3: D = 96 (gcd-based packing: n_seg=4, d_eff=384) with rows
    #     not a multiple of n_seg -> exercises the tiny alignment pad. ---
    Q3, C3 = 6, 16
    D3 = Q3 * C3
    B3, T3 = 2, 7
    k7, k8, k9, key = jax.random.split(key, 4)
    x3 = jax.random.normal(k7, (B3, T3, D3), dtype=jnp.float32)
    gamma3 = jax.random.normal(k8, (D3,), dtype=jnp.float32) * 0.1 + 1.0
    beta3 = jax.random.normal(k9, (D3,), dtype=jnp.float32) * 0.1

    out3 = jax.block_until_ready(layer_norm_4dcf(x3, gamma3, beta3, eps=eps))
    ref3 = layer_norm_ref(x3, gamma3, beta3, eps=eps)
    assert out3.shape == (B3, T3, D3)
    assert jnp.allclose(out3, ref3, atol=3e-5, rtol=3e-5), "mismatch (gcd pack)"

    print("KERNEL_OK")
</pallas_src>

<mosaic_0001>
module attributes {stable_mosaic.version = 11 : i64} {
  func.func @_ln_kernel_packed(%arg0: i32, %arg1: memref<8x128xf32, #tpu.memory_space<vmem>>, %arg2: memref<1x128xf32, #tpu.memory_space<vmem>>, %arg3: memref<1x128xf32, #tpu.memory_space<vmem>>, %arg4: memref<128x4xf32, #tpu.memory_space<vmem>>, %arg5: memref<4x128xf32, #tpu.memory_space<vmem>>, %arg6: memref<8x128xf32, #tpu.memory_space<vmem>>) attributes {dimension_semantics = [#tpu.dimension_semantics<parallel>], iteration_bounds = array<i64: 1>, scalar_prefetch = 0 : i64, scratch_operands = 0 : i64, tpu.core_type = #tpu.core_type<tc>, window_params = [{transform_indices = @transform_0, window_bounds = array<i64: 8, 128>}, {pipeline_mode = #tpu.pipeline_mode<synchronous>, transform_indices = @transform_1, window_bounds = array<i64: 1, 128>}, {pipeline_mode = #tpu.pipeline_mode<synchronous>, transform_indices = @transform_2, window_bounds = array<i64: 1, 128>}, {pipeline_mode = #tpu.pipeline_mode<synchronous>, transform_indices = @transform_3, window_bounds = array<i64: 128, 4>}, {pipeline_mode = #tpu.pipeline_mode<synchronous>, transform_indices = @transform_4, window_bounds = array<i64: 4, 128>}, {transform_indices = @transform_5, window_bounds = array<i64: 8, 128>}]} {
    %c0 = arith.constant 0 : index
    %c0_0 = arith.constant 0 : index
    %0 = vector.load %arg1[%c0, %c0_0] : memref<8x128xf32, #tpu.memory_space<vmem>>, vector<8x128xf32>
    %c0_1 = arith.constant 0 : index
    %c0_2 = arith.constant 0 : index
    %1 = vector.load %arg2[%c0_1, %c0_2] : memref<1x128xf32, #tpu.memory_space<vmem>>, vector<1x128xf32>
    %c0_3 = arith.constant 0 : index
    %c0_4 = arith.constant 0 : index
    %2 = vector.load %arg3[%c0_3, %c0_4] : memref<1x128xf32, #tpu.memory_space<vmem>>, vector<1x128xf32>
    %c0_5 = arith.constant 0 : index
    %c0_6 = arith.constant 0 : index
    %3 = vector.load %arg4[%c0_5, %c0_6] : memref<128x4xf32, #tpu.memory_space<vmem>>, vector<128x4xf32>
    %c0_7 = arith.constant 0 : index
    %c0_8 = arith.constant 0 : index
    %4 = vector.load %arg5[%c0_7, %c0_8] : memref<4x128xf32, #tpu.memory_space<vmem>>, vector<4x128xf32>
    %cst = arith.constant dense<0.000000e+00> : vector<8x4xf32>
    %5 = tpu.matmul %0, %3, %cst {dimension_numbers = #tpu.dot_dimension_numbers<[1], [0], [0], [1], [0, 0, 1, 1], [], []>, precision = #tpu.contract_precision<fp32>} : vector<8x128xf32>, vector<128x4xf32>, vector<8x4xf32> -> vector<8x4xf32>
    %cst_9 = arith.constant 3.125000e-02 : f32
    %6 = vector.broadcast %cst_9 : f32 to vector<8x4xf32>
    %7 = arith.mulf %5, %6 : vector<8x4xf32>
    %cst_10 = arith.constant dense<0.000000e+00> : vector<8x128xf32>
    %8 = tpu.matmul %7, %4, %cst_10 {dimension_numbers = #tpu.dot_dimension_numbers<[1], [0], [0], [1], [0, 0, 1, 1], [], []>, precision = #tpu.contract_precision<fp32>} : vector<8x4xf32>, vector<4x128xf32>, vector<8x128xf32> -> vector<8x128xf32>
    %9 = arith.subf %0, %8 : vector<8x128xf32>
    %10 = arith.mulf %9, %9 : vector<8x128xf32>
    %cst_11 = arith.constant dense<0.000000e+00> : vector<8x4xf32>
    %11 = tpu.matmul %10, %3, %cst_11 {dimension_numbers = #tpu.dot_dimension_numbers<[1], [0], [0], [1], [0, 0, 1, 1], [], []>, precision = #tpu.contract_precision<fp32>} : vector<8x128xf32>, vector<128x4xf32>, vector<8x4xf32> -> vector<8x4xf32>
    %cst_12 = arith.constant 3.125000e-02 : f32
    %12 = vector.broadcast %cst_12 : f32 to vector<8x4xf32>
    %13 = arith.mulf %11, %12 : vector<8x4xf32>
    %cst_13 = arith.constant 9.99999974E-6 : f32
    %14 = vector.broadcast %cst_13 : f32 to vector<8x4xf32>
    %15 = arith.addf %13, %14 : vector<8x4xf32>
    %16 = math.rsqrt %15 : vector<8x4xf32>
    %cst_14 = arith.constant dense<0.000000e+00> : vector<8x128xf32>
    %17 = tpu.matmul %16, %4, %cst_14 {dimension_numbers = #tpu.dot_dimension_numbers<[1], [0], [0], [1], [0, 0, 1, 1], [], []>, precision = #tpu.contract_precision<fp32>} : vector<8x4xf32>, vector<4x128xf32>, vector<8x128xf32> -> vector<8x128xf32>
    %18 = arith.mulf %9, %17 : vector<8x128xf32>
    %19 = vector.broadcast %1 : vector<1x128xf32> to vector<8x128xf32>
    %20 = arith.mulf %18, %19 : vector<8x128xf32>
    %21 = vector.broadcast %2 : vector<1x128xf32> to vector<8x128xf32>
    %22 = arith.addf %20, %21 : vector<8x128xf32>
    %c0_15 = arith.constant 0 : index
    %c0_16 = arith.constant 0 : index
    %23 = vector.load %arg6[%c0_15, %c0_16] : memref<8x128xf32, #tpu.memory_space<vmem>>, vector<8x128xf32>
    tpu.vector_store %arg6[%c0_15, %c0_16], %22 {strides = array<i32>} : memref<8x128xf32, #tpu.memory_space<vmem>>, vector<8x128xf32>,
    return
  }
  func.func @transform_0(%arg0: i32) -> (i32, i32) {
    %c0_i32 = arith.constant 0 : i32
    %c0_i32_0 = arith.constant 0 : i32
    return %arg0, %c0_i32 : i32, i32
  }
  func.func @transform_1(%arg0: i32) -> (i32, i32) {
    %c0_i32 = arith.constant 0 : i32
    %c0_i32_0 = arith.constant 0 : i32
    %c0_i32_1 = arith.constant 0 : i32
    return %c0_i32, %c0_i32_0 : i32, i32
  }
  func.func @transform_2(%arg0: i32) -> (i32, i32) {
    %c0_i32 = arith.constant 0 : i32
    %c0_i32_0 = arith.constant 0 : i32
    %c0_i32_1 = arith.constant 0 : i32
    return %c0_i32, %c0_i32_0 : i32, i32
  }
  func.func @transform_3(%arg0: i32) -> (i32, i32) {
    %c0_i32 = arith.constant 0 : i32
    %c0_i32_0 = arith.constant 0 : i32
    %c0_i32_1 = arith.constant 0 : i32
    return %c0_i32, %c0_i32_0 : i32, i32
  }
  func.func @transform_4(%arg0: i32) -> (i32, i32) {
    %c0_i32 = arith.constant 0 : i32
    %c0_i32_0 = arith.constant 0 : i32
    %c0_i32_1 = arith.constant 0 : i32
    return %c0_i32, %c0_i32_0 : i32, i32
  }
  func.func @transform_5(%arg0: i32) -> (i32, i32) {
    %c0_i32 = arith.constant 0 : i32
    %c0_i32_0 = arith.constant 0 : i32
    return %arg0, %c0_i32 : i32, i32
  }
}

</mosaic_0001>

<llo_original>
// kernel: tpu_custom_call.1
$region0: #{tpu_custom_call.1}
  #allocation0 [shape = 'u32[]', space=smem, size = 0x4, offset = 0x4, fixed_abs, tag = 'smem constant byte address 0x4 - core index']
  #allocation1 [shape = 'u32[72,128]{1,0:T(1,128)}', space=vmem, size = 0x9000, scoped, tag = 'internal scratch']
  %s0 = inlined_call_operand.vmem [shape: f32[4,128], index: 0, kind: input, shape index: {}]
  %s1 = inlined_call_operand.vmem [shape: f32[1,128], index: 1, kind: input, shape index: {}]
  %s2 = inlined_call_operand.vmem [shape: f32[1,128], index: 2, kind: input, shape index: {}]
  %s3 = inlined_call_operand.vmem [shape: f32[128,4], index: 3, kind: input, shape index: {}]
  %s4 = inlined_call_operand.vmem [shape: f32[4,128], index: 4, kind: input, shape index: {}]
  %s5 = inlined_call_operand.hbm [shape: f32[4,128], index: 5, kind: output, shape index: {}]
  %s6 = sld [smem:[#allocation0]]
  $region30: #{tpu_custom_call.1} parent=0
    _
  %s8 = ssub.s32 1, %s6
  %s9 = scalar_select 0, %s8, %s6
  $region1: #{tpu_custom_call.1} parent=0
    #allocation2 [shape = 'u8[4096]{0}', space=vmem, size = 0x1000, scoped, tag = 'output window, operand 0, single buffered']
    #allocation3 [shape = 's32[1]{0}', space=sflag, size = 0x4, scoped, tag = 'scoped memory for tpu_custom_call.1']
    %10 = vsyncpa [#allocation3], 0
    // Predicated region
    $region2: #{tpu_custom_call.1} parent=1 // pred_check
      _
    $region3: #{tpu_custom_call.1} parent=1 // pred_check_branch
      %12 = sbr.rel (0) target = $region5
    $region4: #{tpu_custom_call.1} parent=1 // pred_region
      _
    $region5: #{tpu_custom_call.1} parent=1 // pred_fallthru
      _
    // Predicated region
    $region6: #{tpu_custom_call.1} parent=1 // pred_check
      _
    $region7: #{tpu_custom_call.1} parent=1 // pred_check_branch
      %14 = sbr.rel (0) target = $region9
    $region8: #{tpu_custom_call.1} parent=1 // pred_region
      _
    $region9: #{tpu_custom_call.1} parent=1 // pred_fallthru
      _
    // Predicated region
    $region10: #{tpu_custom_call.1} parent=1 // pred_check
      _
    $region11: #{tpu_custom_call.1} parent=1 // pred_check_branch
      %16 = sbr.rel (0) target = $region13
    $region12: #{tpu_custom_call.1} parent=1 // pred_region
      _
    $region13: #{tpu_custom_call.1} parent=1 // pred_fallthru
      _
    // Predicated region
    $region14: #{tpu_custom_call.1} parent=1 // pred_check
      _
    $region15: #{tpu_custom_call.1} parent=1 // pred_check_branch
      %18 = sbr.rel (0) target = $region17
    $region16: #{tpu_custom_call.1} parent=1 // pred_region
      _
    $region17: #{tpu_custom_call.1} parent=1 // pred_fallthru
      _
    // Predicated region
    $region18: #{tpu_custom_call.1} parent=1 // pred_check
      _
    $region19: #{tpu_custom_call.1} parent=1 // pred_check_branch
      %20 = sbr.rel (0) target = $region21
    $region20: #{tpu_custom_call.1} parent=1 // pred_region
      _
    $region21: #{tpu_custom_call.1} parent=1 // pred_fallthru
      _
    %v21 = vld [vmem:[%s0] sm:$0xff]
    %v22 = vld [vmem:[%s1] sm:$0x1]
    %v23 = vld [vmem:[%s2] sm:$0x1]
    %v24 = vld [vmem:[%s3] sm:$0xff]
    %v25 = vld [vmem:[%s3 + $0x8] sm:$0xff]
    %v26 = vld [vmem:[%s3 + $0x10] sm:$0xff]
    %v27 = vld [vmem:[%s3 + $0x18] sm:$0xff]
    %v28 = vld [vmem:[%s3 + $0x20] sm:$0xff]
    %v29 = vld [vmem:[%s3 + $0x28] sm:$0xff]
    %v30 = vld [vmem:[%s3 + $0x30] sm:$0xff]
    %v31 = vld [vmem:[%s3 + $0x38] sm:$0xff]
    %v32 = vld [vmem:[%s3 + $0x40] sm:$0xff]
    %v33 = vld [vmem:[%s3 + $0x48] sm:$0xff]
    %v34 = vld [vmem:[%s3 + $0x50] sm:$0xff]
    %v35 = vld [vmem:[%s3 + $0x58] sm:$0xff]
    %v36 = vld [vmem:[%s3 + $0x60] sm:$0xff]
    %v37 = vld [vmem:[%s3 + $0x68] sm:$0xff]
    %v38 = vld [vmem:[%s3 + $0x70] sm:$0xff]
    %v39 = vld [vmem:[%s3 + $0x78] sm:$0xff]
    %v40 = vld [vmem:[%s4] sm:$0xf]
    %v41 = vand.u32 %v39, 4294901760
    %42 = vmatpush.msra.mxu0 %v41
    %v43 = vand.u32 %v38, 4294901760
    %44 = vmatpush.msra.mxu0 %v43
    %v45 = vand.u32 %v37, 4294901760
    %46 = vmatpush.msra.mxu0 %v45
    %v47 = vand.u32 %v36, 4294901760
    %48 = vmatpush.msra.mxu0 %v47
    %v49 = vand.u32 %v35, 4294901760
    %50 = vmatpush.msra.mxu0 %v49
    %v51 = vand.u32 %v34, 4294901760
    %52 = vmatpush.msra.mxu0 %v51
    %v53 = vand.u32 %v33, 4294901760
    %54 = vmatpush.msra.mxu0 %v53
    %v55 = vand.u32 %v32, 4294901760
    %56 = vmatpush.msra.mxu0 %v55
    %v57 = vand.u32 %v31, 4294901760
    %58 = vmatpush.msra.mxu0 %v57
    %v59 = vand.u32 %v30, 4294901760
    %60 = vmatpush.msra.mxu0 %v59
    %v61 = vand.u32 %v29, 4294901760
    %62 = vmatpush.msra.mxu0 %v61
    %v63 = vand.u32 %v28, 4294901760
    %64 = vmatpush.msra.mxu0 %v63
    %v65 = vand.u32 %v27, 4294901760
    %66 = vmatpush.msra.mxu0 %v65
    %v67 = vand.u32 %v26, 4294901760
    %68 = vmatpush.msra.mxu0 %v67
    %v69 = vand.u32 %v25, 4294901760
    %70 = vmatpush.msra.mxu0 %v69
    %v71 = vand.u32 %v24, 4294901760
    %72 = vmatpush.msra.mxu0 %v71
    %v73 = vand.u32 %v21, 4294901760
    %v74 = vsub.f32 %v21, %v73
    %v75 = vand.u32 %v74, 4294901760
    %v76 = vsub.f32 %v74, %v75
    %v77 = vand.u32 %v76, 4294901760
    %78 = vmatmul.f32.gmra.mxu0 %v77
    %v79 = vpop.f32.mrf.mxu0
    %v80 = vadd.f32 0.0, %v79
    %81 = vdwg.mxu0
    %v82 = vand.u32 %v39, 4294901760
    %v83 = vsub.f32 %v39, %v82
    %v84 = vand.u32 %v83, 4294901760
    %v85 = vsub.f32 %v83, %v84
    %v86 = vand.u32 %v85, 4294901760
    %87 = vmatpush.msra.mxu0 %v86
    %v88 = vand.u32 %v38, 4294901760
    %v89 = vsub.f32 %v38, %v88
    %v90 = vand.u32 %v89, 4294901760
    %v91 = vsub.f32 %v89, %v90
    %v92 = vand.u32 %v91, 4294901760
    %93 = vmatpush.msra.mxu0 %v92
    %v94 = vand.u32 %v37, 4294901760
    %v95 = vsub.f32 %v37, %v94
    %v96 = vand.u32 %v95, 4294901760
    %v97 = vsub.f32 %v95, %v96
    %v98 = vand.u32 %v97, 4294901760
    %99 = vmatpush.msra.mxu0 %v98
    %v100 = vand.u32 %v36, 4294901760
    %v101 = vsub.f32 %v36, %v100
    %v102 = vand.u32 %v101, 4294901760
    %v103 = vsub.f32 %v101, %v102
    %v104 = vand.u32 %v103, 4294901760
    %105 = vmatpush.msra.mxu0 %v104
    %v106 = vand.u32 %v35, 4294901760
    %v107 = vsub.f32 %v35, %v106
    %v108 = vand.u32 %v107, 4294901760
    %v109 = vsub.f32 %v107, %v108
    %v110 = vand.u32 %v109, 4294901760
    %111 = vmatpush.msra.mxu0 %v110
    %v112 = vand.u32 %v34, 4294901760
    %v113 = vsub.f32 %v34, %v112
    %v114 = vand.u32 %v113, 4294901760
    %v115 = vsub.f32 %v113, %v114
    %v116 = vand.u32 %v115, 4294901760
    %117 = vmatpush.msra.mxu0 %v116
    %v118 = vand.u32 %v33, 4294901760
    %v119 = vsub.f32 %v33, %v118
    %v120 = vand.u32 %v119, 4294901760
    %v121 = vsub.f32 %v119, %v120
    %v122 = vand.u32 %v121, 4294901760
    %123 = vmatpush.msra.mxu0 %v122
    %v124 = vand.u32 %v32, 4294901760
    %v125 = vsub.f32 %v32, %v124
    %v126 = vand.u32 %v125, 4294901760
    %v127 = vsub.f32 %v125, %v126
    %v128 = vand.u32 %v127, 4294901760
    %129 = vmatpush.msra.mxu0 %v128
    %v130 = vand.u32 %v31, 4294901760
    %v131 = vsub.f32 %v31, %v130
    %v132 = vand.u32 %v131, 4294901760
    %v133 = vsub.f32 %v131, %v132
    %v134 = vand.u32 %v133, 4294901760
    %135 = vmatpush.msra.mxu0 %v134
    %v136 = vand.u32 %v30, 4294901760
    %v137 = vsub.f32 %v30, %v136
    %v138 = vand.u32 %v137, 4294901760
    %v139 = vsub.f32 %v137, %v138
    %v140 = vand.u32 %v139, 4294901760
    %141 = vmatpush.msra.mxu0 %v140
    %v142 = vand.u32 %v29, 4294901760
    %v143 = vsub.f32 %v29, %v142
    %v144 = vand.u32 %v143, 4294901760
    %v145 = vsub.f32 %v143, %v144
    %v146 = vand.u32 %v145, 4294901760
    %147 = vmatpush.msra.mxu0 %v146
    %v148 = vand.u32 %v28, 4294901760
    %v149 = vsub.f32 %v28, %v148
    %v150 = vand.u32 %v149, 4294901760
    %v151 = vsub.f32 %v149, %v150
    %v152 = vand.u32 %v151, 4294901760
    %153 = vmatpush.msra.mxu0 %v152
    %v154 = vand.u32 %v27, 4294901760
    %v155 = vsub.f32 %v27, %v154
    %v156 = vand.u32 %v155, 4294901760
    %v157 = vsub.f32 %v155, %v156
    %v158 = vand.u32 %v157, 4294901760
    %159 = vmatpush.msra.mxu0 %v158
    %v160 = vand.u32 %v26, 4294901760
    %v161 = vsub.f32 %v26, %v160
    %v162 = vand.u32 %v161, 4294901760
    %v163 = vsub.f32 %v161, %v162
    %v164 = vand.u32 %v163, 4294901760
    %165 = vmatpush.msra.mxu0 %v164
    %v166 = vand.u32 %v25, 4294901760
    %v167 = vsub.f32 %v25, %v166
    %v168 = vand.u32 %v167, 4294901760
    %v169 = vsub.f32 %v167, %v168
    %v170 = vand.u32 %v169, 4294901760
    %171 = vmatpush.msra.mxu0 %v170
    %v172 = vand.u32 %v24, 4294901760
    %v173 = vsub.f32 %v24, %v172
    %v174 = vand.u32 %v173, 4294901760
    %v175 = vsub.f32 %v173, %v174
    %v176 = vand.u32 %v175, 4294901760
    %177 = vmatpush.msra.mxu0 %v176
    %v178 = vand.u32 %v21, 4294901760
    %179 = vmatmul.f32.gmra.mxu0 %v178
    %v180 = vpop.f32.mrf.mxu0
    %v181 = vadd.f32 %v80, %v180
    %182 = vdwg.mxu0
    %v183 = vand.u32 %v39, 4294901760
    %v184 = vsub.f32 %v39, %v183
    %185 = vmatpush.msra.mxu0 %v184
    %v186 = vand.u32 %v38, 4294901760
    %v187 = vsub.f32 %v38, %v186
    %188 = vmatpush.msra.mxu0 %v187
    %v189 = vand.u32 %v37, 4294901760
    %v190 = vsub.f32 %v37, %v189
    %191 = vmatpush.msra.mxu0 %v190
    %v192 = vand.u32 %v36, 4294901760
    %v193 = vsub.f32 %v36, %v192
    %194 = vmatpush.msra.mxu0 %v193
    %v195 = vand.u32 %v35, 4294901760
    %v196 = vsub.f32 %v35, %v195
    %197 = vmatpush.msra.mxu0 %v196
    %v198 = vand.u32 %v34, 4294901760
    %v199 = vsub.f32 %v34, %v198
    %200 = vmatpush.msra.mxu0 %v199
    %v201 = vand.u32 %v33, 4294901760
    %v202 = vsub.f32 %v33, %v201
    %203 = vmatpush.msra.mxu0 %v202
    %v204 = vand.u32 %v32, 4294901760
    %v205 = vsub.f32 %v32, %v204
    %206 = vmatpush.msra.mxu0 %v205
    %v207 = vand.u32 %v31, 4294901760
    %v208 = vsub.f32 %v31, %v207
    %209 = vmatpush.msra.mxu0 %v208
    %v210 = vand.u32 %v30, 4294901760
    %v211 = vsub.f32 %v30, %v210
    %212 = vmatpush.msra.mxu0 %v211
    %v213 = vand.u32 %v29, 4294901760
    %v214 = vsub.f32 %v29, %v213
    %215 = vmatpush.msra.mxu0 %v214
    %v216 = vand.u32 %v28, 4294901760
    %v217 = vsub.f32 %v28, %v216
    %218 = vmatpush.msra.mxu0 %v217
    %v219 = vand.u32 %v27, 4294901760
    %v220 = vsub.f32 %v27, %v219
    %221 = vmatpush.msra.mxu0 %v220
    %v222 = vand.u32 %v26, 4294901760
    %v223 = vsub.f32 %v26, %v222
    %224 = vmatpush.msra.mxu0 %v223
    %v225 = vand.u32 %v25, 4294901760
    %v226 = vsub.f32 %v25, %v225
    %227 = vmatpush.msra.mxu0 %v226
    %v228 = vand.u32 %v24, 4294901760
    %v229 = vsub.f32 %v24, %v228
    %230 = vmatpush.msra.mxu0 %v229
    %v231 = vand.u32 %v21, 4294901760
    %v232 = vsub.f32 %v21, %v231
    %233 = vmatmul.f32.gmra.mxu0 %v232
    %v234 = vpop.f32.mrf.mxu0
    %v235 = vadd.f32 %v181, %v234
    %236 = vdwg.mxu0
    %v237 = vand.u32 %v39, 4294901760
    %238 = vmatpush.msra.mxu0 %v237
    %v239 = vand.u32 %v38, 4294901760
    %240 = vmatpush.msra.mxu0 %v239
    %v241 = vand.u32 %v37, 4294901760
    %242 = vmatpush.msra.mxu0 %v241
    %v243 = vand.u32 %v36, 4294901760
    %244 = vmatpush.msra.mxu0 %v243
    %v245 = vand.u32 %v35, 4294901760
    %246 = vmatpush.msra.mxu0 %v245
    %v247 = vand.u32 %v34, 4294901760
    %248 = vmatpush.msra.mxu0 %v247
    %v249 = vand.u32 %v33, 4294901760
    %250 = vmatpush.msra.mxu0 %v249
    %v251 = vand.u32 %v32, 4294901760
    %252 = vmatpush.msra.mxu0 %v251
    %v253 = vand.u32 %v31, 4294901760
    %254 = vmatpush.msra.mxu0 %v253
    %v255 = vand.u32 %v30, 4294901760
    %256 = vmatpush.msra.mxu0 %v255
    %v257 = vand.u32 %v29, 4294901760
    %258 = vmatpush.msra.mxu0 %v257
    %v259 = vand.u32 %v28, 4294901760
    %260 = vmatpush.msra.mxu0 %v259
    %v261 = vand.u32 %v27, 4294901760
    %262 = vmatpush.msra.mxu0 %v261
    %v263 = vand.u32 %v26, 4294901760
    %264 = vmatpush.msra.mxu0 %v263
    %v265 = vand.u32 %v25, 4294901760
    %266 = vmatpush.msra.mxu0 %v265
    %v267 = vand.u32 %v24, 4294901760
    %268 = vmatpush.msra.mxu0 %v267
    %v269 = vand.u32 %v21, 4294901760
    %v270 = vsub.f32 %v21, %v269
    %v271 = vand.u32 %v270, 4294901760
    %272 = vmatmul.f32.gmra.mxu0 %v271
    %v273 = vpop.f32.mrf.mxu0
    %v274 = vadd.f32 %v235, %v273
    %275 = vdwg.mxu0
    %v276 = vand.u32 %v39, 4294901760
    %v277 = vsub.f32 %v39, %v276
    %v278 = vand.u32 %v277, 4294901760
    %279 = vmatpush.msra.mxu0 %v278
    %v280 = vand.u32 %v38, 4294901760
    %v281 = vsub.f32 %v38, %v280
    %v282 = vand.u32 %v281, 4294901760
    %283 = vmatpush.msra.mxu0 %v282
    %v284 = vand.u32 %v37, 4294901760
    %v285 = vsub.f32 %v37, %v284
    %v286 = vand.u32 %v285, 4294901760
    %287 = vmatpush.msra.mxu0 %v286
    %v288 = vand.u32 %v36, 4294901760
    %v289 = vsub.f32 %v36, %v288
    %v290 = vand.u32 %v289, 4294901760
    %291 = vmatpush.msra.mxu0 %v290
    %v292 = vand.u32 %v35, 4294901760
    %v293 = vsub.f32 %v35, %v292
    %v294 = vand.u32 %v293, 4294901760
    %295 = vmatpush.msra.mxu0 %v294
    %v296 = vand.u32 %v34, 4294901760
    %v297 = vsub.f32 %v34, %v296
    %v298 = vand.u32 %v297, 4294901760
    %299 = vmatpush.msra.mxu0 %v298
    %v300 = vand.u32 %v33, 4294901760
    %v301 = vsub.f32 %v33, %v300
    %v302 = vand.u32 %v301, 4294901760
    %303 = vmatpush.msra.mxu0 %v302
    %v304 = vand.u32 %v32, 4294901760
    %v305 = vsub.f32 %v32, %v304
    %v306 = vand.u32 %v305, 4294901760
    %307 = vmatpush.msra.mxu0 %v306
    %v308 = vand.u32 %v31, 4294901760
    %v309 = vsub.f32 %v31, %v308
    %v310 = vand.u32 %v309, 4294901760
    %311 = vmatpush.msra.mxu0 %v310
    %v312 = vand.u32 %v30, 4294901760
    %v313 = vsub.f32 %v30, %v312
    %v314 = vand.u32 %v313, 4294901760
    %315 = vmatpush.msra.mxu0 %v314
    %v316 = vand.u32 %v29, 4294901760
    %v317 = vsub.f32 %v29, %v316
    %v318 = vand.u32 %v317, 4294901760
    %319 = vmatpush.msra.mxu0 %v318
    %v320 = vand.u32 %v28, 4294901760
    %v321 = vsub.f32 %v28, %v320
    %v322 = vand.u32 %v321, 4294901760
    %323 = vmatpush.msra.mxu0 %v322
    %v324 = vand.u32 %v27, 4294901760
    %v325 = vsub.f32 %v27, %v324
    %v326 = vand.u32 %v325, 4294901760
    %327 = vmatpush.msra.mxu0 %v326
    %v328 = vand.u32 %v26, 4294901760
    %v329 = vsub.f32 %v26, %v328
    %v330 = vand.u32 %v329, 4294901760
    %331 = vmatpush.msra.mxu0 %v330
    %v332 = vand.u32 %v25, 4294901760
    %v333 = vsub.f32 %v25, %v332
    %v334 = vand.u32 %v333, 4294901760
    %335 = vmatpush.msra.mxu0 %v334
    %v336 = vand.u32 %v24, 4294901760
    %v337 = vsub.f32 %v24, %v336
    %v338 = vand.u32 %v337, 4294901760
    %339 = vmatpush.msra.mxu0 %v338
    %v340 = vand.u32 %v21, 4294901760
    %341 = vmatmul.f32.gmra.mxu0 %v340
    %v342 = vpop.f32.mrf.mxu0
    %v343 = vadd.f32 %v274, %v342
    %344 = vdwg.mxu0
    %v345 = vand.u32 %v39, 4294901760
    %346 = vmatpush.msra.mxu0 %v345
    %v347 = vand.u32 %v38, 4294901760
    %348 = vmatpush.msra.mxu0 %v347
    %v349 = vand.u32 %v37, 4294901760
    %350 = vmatpush.msra.mxu0 %v349
    %v351 = vand.u32 %v36, 4294901760
    %352 = vmatpush.msra.mxu0 %v351
    %v353 = vand.u32 %v35, 4294901760
    %354 = vmatpush.msra.mxu0 %v353
    %v355 = vand.u32 %v34, 4294901760
    %356 = vmatpush.msra.mxu0 %v355
    %v357 = vand.u32 %v33, 4294901760
    %358 = vmatpush.msra.mxu0 %v357
    %v359 = vand.u32 %v32, 4294901760
    %360 = vmatpush.msra.mxu0 %v359
    %v361 = vand.u32 %v31, 4294901760
    %362 = vmatpush.msra.mxu0 %v361
    %v363 = vand.u32 %v30, 4294901760
    %364 = vmatpush.msra.mxu0 %v363
    %v365 = vand.u32 %v29, 4294901760
    %366 = vmatpush.msra.mxu0 %v365
    %v367 = vand.u32 %v28, 4294901760
    %368 = vmatpush.msra.mxu0 %v367
    %v369 = vand.u32 %v27, 4294901760
    %370 = vmatpush.msra.mxu0 %v369
    %v371 = vand.u32 %v26, 4294901760
    %372 = vmatpush.msra.mxu0 %v371
    %v373 = vand.u32 %v25, 4294901760
    %374 = vmatpush.msra.mxu0 %v373
    %v375 = vand.u32 %v24, 4294901760
    %376 = vmatpush.msra.mxu0 %v375
    %v377 = vand.u32 %v21, 4294901760
    %378 = vmatmul.f32.gmra.mxu0 %v377
    %v379 = vpop.f32.mrf.mxu0
    %v380 = vadd.f32 %v343, %v379
    %381 = vdwg.mxu0
    %v382 = vmul.f32 %v380, 0.03125
    %vm383 = vcmask 31744
    %v385 = vsel %vm383, %v382, 0
    %vm387 = vcmask 1043456
    %v389 = vsel %vm387, %v40, 0
    %391 = vmatpush.msra.mxu0 0.0
    %392 = vmatpush.msra.mxu0 0.0
    %393 = vmatpush.msra.mxu0 0.0
    %394 = vmatpush.msra.mxu0 0.0
    %395 = vmatpush.msra.mxu0 0.0
    %396 = vmatpush.msra.mxu0 0.0
    %397 = vmatpush.msra.mxu0 0.0
    %398 = vmatpush.msra.mxu0 0.0
    %399 = vmatpush.msra.mxu0 0.0
    %400 = vmatpush.msra.mxu0 0.0
    %401 = vmatpush.msra.mxu0 0.0
    %402 = vmatpush.msra.mxu0 0.0
    %403 = vmatpush.msra.mxu0 0.0
    %404 = vmatpush.msra.mxu0 0.0
    %405 = vmatpush.msra.mxu0 0.0
    %v406 = vand.u32 %v389, 4294901760
    %407 = vmatpush.msra.mxu0 %v406
    %v408 = vand.u32 %v385, 4294901760
    %v409 = vsub.f32 %v385, %v408
    %v410 = vand.u32 %v409, 4294901760
    %v411 = vsub.f32 %v409, %v410
    %v412 = vand.u32 %v411, 4294901760
    %413 = vmatmul.f32.gmra.mxu0 %v412
    %v414 = vpop.f32.mrf.mxu0
    %v415 = vadd.f32 0.0, %v414
    %416 = vdwg.mxu0
    %417 = vmatpush.msra.mxu0 0.0
    %418 = vmatpush.msra.mxu0 0.0
    %419 = vmatpush.msra.mxu0 0.0
    %420 = vmatpush.msra.mxu0 0.0
    %421 = vmatpush.msra.mxu0 0.0
    %422 = vmatpush.msra.mxu0 0.0
    %423 = vmatpush.msra.mxu0 0.0
    %424 = vmatpush.msra.mxu0 0.0
    %425 = vmatpush.msra.mxu0 0.0
    %426 = vmatpush.msra.mxu0 0.0
    %427 = vmatpush.msra.mxu0 0.0
    %428 = vmatpush.msra.mxu0 0.0
    %429 = vmatpush.msra.mxu0 0.0
    %430 = vmatpush.msra.mxu0 0.0
    %431 = vmatpush.msra.mxu0 0.0
    %v432 = vand.u32 %v389, 4294901760
    %v433 = vsub.f32 %v389, %v432
    %v434 = vand.u32 %v433, 4294901760
    %v435 = vsub.f32 %v433, %v434
    %v436 = vand.u32 %v435, 4294901760
    %437 = vmatpush.msra.mxu0 %v436
    %v438 = vand.u32 %v385, 4294901760
    %439 = vmatmul.f32.gmra.mxu0 %v438
    %v440 = vpop.f32.mrf.mxu0
    %v441 = vadd.f32 %v415, %v440
    %442 = vdwg.mxu0
    %443 = vmatpush.msra.mxu0 0.0
    %444 = vmatpush.msra.mxu0 0.0
    %445 = vmatpush.msra.mxu0 0.0
    %446 = vmatpush.msra.mxu0 0.0
    %447 = vmatpush.msra.mxu0 0.0
    %448 = vmatpush.msra.mxu0 0.0
    %449 = vmatpush.msra.mxu0 0.0
    %450 = vmatpush.msra.mxu0 0.0
    %451 = vmatpush.msra.mxu0 0.0
    %452 = vmatpush.msra.mxu0 0.0
    %453 = vmatpush.msra.mxu0 0.0
    %454 = vmatpush.msra.mxu0 0.0
    %455 = vmatpush.msra.mxu0 0.0
    %456 = vmatpush.msra.mxu0 0.0
    %457 = vmatpush.msra.mxu0 0.0
    %v458 = vand.u32 %v389, 4294901760
    %v459 = vsub.f32 %v389, %v458
    %460 = vmatpush.msra.mxu0 %v459
    %v461 = vand.u32 %v385, 4294901760
    %v462 = vsub.f32 %v385, %v461
    %463 = vmatmul.f32.gmra.mxu0 %v462
    %v464 = vpop.f32.mrf.mxu0
    %v465 = vadd.f32 %v441, %v464
    %466 = vdwg.mxu0
    %467 = vmatpush.msra.mxu0 0.0
    %468 = vmatpush.msra.mxu0 0.0
    %469 = vmatpush.msra.mxu0 0.0
    %470 = vmatpush.msra.mxu0 0.0
    %471 = vmatpush.msra.mxu0 0.0
    %472 = vmatpush.msra.mxu0 0.0
    %473 = vmatpush.msra.mxu0 0.0
    %474 = vmatpush.msra.mxu0 0.0
    %475 = vmatpush.msra.mxu0 0.0
    %476 = vmatpush.msra.mxu0 0.0
    %477 = vmatpush.msra.mxu0 0.0
    %478 = vmatpush.msra.mxu0 0.0
    %479 = vmatpush.msra.mxu0 0.0
    %480 = vmatpush.msra.mxu0 0.0
    %481 = vmatpush.msra.mxu0 0.0
    %v482 = vand.u32 %v389, 4294901760
    %483 = vmatpush.msra.mxu0 %v482
    %v484 = vand.u32 %v385, 4294901760
    %v485 = vsub.f32 %v385, %v484
    %v486 = vand.u32 %v485, 4294901760
    %487 = vmatmul.f32.gmra.mxu0 %v486
    %v488 = vpop.f32.mrf.mxu0
    %v489 = vadd.f32 %v465, %v488
    %490 = vdwg.mxu0
    %491 = vmatpush.msra.mxu0 0.0
    %492 = vmatpush.msra.mxu0 0.0
    %493 = vmatpush.msra.mxu0 0.0
    %494 = vmatpush.msra.mxu0 0.0
    %495 = vmatpush.msra.mxu0 0.0
    %496 = vmatpush.msra.mxu0 0.0
    %497 = vmatpush.msra.mxu0 0.0
    %498 = vmatpush.msra.mxu0 0.0
    %499 = vmatpush.msra.mxu0 0.0
    %500 = vmatpush.msra.mxu0 0.0
    %501 = vmatpush.msra.mxu0 0.0
    %502 = vmatpush.msra.mxu0 0.0
    %503 = vmatpush.msra.mxu0 0.0
    %504 = vmatpush.msra.mxu0 0.0
    %505 = vmatpush.msra.mxu0 0.0
    %v506 = vand.u32 %v389, 4294901760
    %v507 = vsub.f32 %v389, %v506
    %v508 = vand.u32 %v507, 4294901760
    %509 = vmatpush.msra.mxu0 %v508
    %v510 = vand.u32 %v385, 4294901760
    %511 = vmatmul.f32.gmra.mxu0 %v510
    %v512 = vpop.f32.mrf.mxu0
    %v513 = vadd.f32 %v489, %v512
    %514 = vdwg.mxu0
    %515 = vmatpush.msra.mxu0 0.0
    %516 = vmatpush.msra.mxu0 0.0
    %517 = vmatpush.msra.mxu0 0.0
    %518 = vmatpush.msra.mxu0 0.0
    %519 = vmatpush.msra.mxu0 0.0
    %520 = vmatpush.msra.mxu0 0.0
    %521 = vmatpush.msra.mxu0 0.0
    %522 = vmatpush.msra.mxu0 0.0
    %523 = vmatpush.msra.mxu0 0.0
    %524 = vmatpush.msra.mxu0 0.0
    %525 = vmatpush.msra.mxu0 0.0
    %526 = vmatpush.msra.mxu0 0.0
    %527 = vmatpush.msra.mxu0 0.0
    %528 = vmatpush.msra.mxu0 0.0
    %529 = vmatpush.msra.mxu0 0.0
    %v530 = vand.u32 %v389, 4294901760
    %531 = vmatpush.msra.mxu0 %v530
    %v532 = vand.u32 %v385, 4294901760
    %533 = vmatmul.f32.gmra.mxu0 %v532
    %v534 = vpop.f32.mrf.mxu0
    %v535 = vadd.f32 %v513, %v534
    %536 = vdwg.mxu0
    %v537 = vsub.f32 %v21, %v535
    %v538 = vmul.f32 %v537, %v537
    %v539 = vand.u32 %v39, 4294901760
    %540 = vmatpush.msra.mxu0 %v539
    %v541 = vand.u32 %v38, 4294901760
    %542 = vmatpush.msra.mxu0 %v541
    %v543 = vand.u32 %v37, 4294901760
    %544 = vmatpush.msra.mxu0 %v543
    %v545 = vand.u32 %v36, 4294901760
    %546 = vmatpush.msra.mxu0 %v545
    %v547 = vand.u32 %v35, 4294901760
    %548 = vmatpush.msra.mxu0 %v547
    %v549 = vand.u32 %v34, 4294901760
    %550 = vmatpush.msra.mxu0 %v549
    %v551 = vand.u32 %v33, 4294901760
    %552 = vmatpush.msra.mxu0 %v551
    %v553 = vand.u32 %v32, 4294901760
    %554 = vmatpush.msra.mxu0 %v553
    %v555 = vand.u32 %v31, 4294901760
    %556 = vmatpush.msra.mxu0 %v555
    %v557 = vand.u32 %v30, 4294901760
    %558 = vmatpush.msra.mxu0 %v557
    %v559 = vand.u32 %v29, 4294901760
    %560 = vmatpush.msra.mxu0 %v559
    %v561 = vand.u32 %v28, 4294901760
    %562 = vmatpush.msra.mxu0 %v561
    %v563 = vand.u32 %v27, 4294901760
    %564 = vmatpush.msra.mxu0 %v563
    %v565 = vand.u32 %v26, 4294901760
    %566 = vmatpush.msra.mxu0 %v565
    %v567 = vand.u32 %v25, 4294901760
    %568 = vmatpush.msra.mxu0 %v567
    %v569 = vand.u32 %v24, 4294901760
    %570 = vmatpush.msra.mxu0 %v569
    %v571 = vand.u32 %v538, 4294901760
    %v572 = vsub.f32 %v538, %v571
    %v573 = vand.u32 %v572, 4294901760
    %v574 = vsub.f32 %v572, %v573
    %v575 = vand.u32 %v574, 4294901760
    %576 = vmatmul.f32.gmra.mxu0 %v575
    %v577 = vpop.f32.mrf.mxu0
    %v578 = vadd.f32 0.0, %v577
    %579 = vdwg.mxu0
    %v580 = vand.u32 %v39, 4294901760
    %v581 = vsub.f32 %v39, %v580
    %v582 = vand.u32 %v581, 4294901760
    %v583 = vsub.f32 %v581, %v582
    %v584 = vand.u32 %v583, 4294901760
    %585 = vmatpush.msra.mxu0 %v584
    %v586 = vand.u32 %v38, 4294901760
    %v587 = vsub.f32 %v38, %v586
    %v588 = vand.u32 %v587, 4294901760
    %v589 = vsub.f32 %v587, %v588
    %v590 = vand.u32 %v589, 4294901760
    %591 = vmatpush.msra.mxu0 %v590
    %v592 = vand.u32 %v37, 4294901760
    %v593 = vsub.f32 %v37, %v592
    %v594 = vand.u32 %v593, 4294901760
    %v595 = vsub.f32 %v593, %v594
    %v596 = vand.u32 %v595, 4294901760
    %597 = vmatpush.msra.mxu0 %v596
    %v598 = vand.u32 %v36, 4294901760
    %v599 = vsub.f32 %v36, %v598
    %v600 = vand.u32 %v599, 4294901760
    %v601 = vsub.f32 %v599, %v600
    %v602 = vand.u32 %v601, 4294901760
    %603 = vmatpush.msra.mxu0 %v602
    %v604 = vand.u32 %v35, 4294901760
    %v605 = vsub.f32 %v35, %v604
    %v606 = vand.u32 %v605, 4294901760
    %v607 = vsub.f32 %v605, %v606
    %v608 = vand.u32 %v607, 4294901760
    %609 = vmatpush.msra.mxu0 %v608
    %v610 = vand.u32 %v34, 4294901760
    %v611 = vsub.f32 %v34, %v610
    %v612 = vand.u32 %v611, 4294901760
    %v613 = vsub.f32 %v611, %v612
    %v614 = vand.u32 %v613, 4294901760
    %615 = vmatpush.msra.mxu0 %v614
    %v616 = vand.u32 %v33, 4294901760
    %v617 = vsub.f32 %v33, %v616
    %v618 = vand.u32 %v617, 4294901760
    %v619 = vsub.f32 %v617, %v618
    %v620 = vand.u32 %v619, 4294901760
    %621 = vmatpush.msra.mxu0 %v620
    %v622 = vand.u32 %v32, 4294901760
    %v623 = vsub.f32 %v32, %v622
    %v624 = vand.u32 %v623, 4294901760
    %v625 = vsub.f32 %v623, %v624
    %v626 = vand.u32 %v625, 4294901760
    %627 = vmatpush.msra.mxu0 %v626
    %v628 = vand.u32 %v31, 4294901760
    %v629 = vsub.f32 %v31, %v628
    %v630 = vand.u32 %v629, 4294901760
    %v631 = vsub.f32 %v629, %v630
    %v632 = vand.u32 %v631, 4294901760
    %633 = vmatpush.msra.mxu0 %v632
    %v634 = vand.u32 %v30, 4294901760
    %v635 = vsub.f32 %v30, %v634
    %v636 = vand.u32 %v635, 4294901760
    %v637 = vsub.f32 %v635, %v636
    %v638 = vand.u32 %v637, 4294901760
    %639 = vmatpush.msra.mxu0 %v638
    %v640 = vand.u32 %v29, 4294901760
    %v641 = vsub.f32 %v29, %v640
    %v642 = vand.u32 %v641, 4294901760
    %v643 = vsub.f32 %v641, %v642
    %v644 = vand.u32 %v643, 4294901760
    %645 = vmatpush.msra.mxu0 %v644
    %v646 = vand.u32 %v28, 4294901760
    %v647 = vsub.f32 %v28, %v646
    %v648 = vand.u32 %v647, 4294901760
    %v649 = vsub.f32 %v647, %v648
    %v650 = vand.u32 %v649, 4294901760
    %651 = vmatpush.msra.mxu0 %v650
    %v652 = vand.u32 %v27, 4294901760
    %v653 = vsub.f32 %v27, %v652
    %v654 = vand.u32 %v653, 4294901760
    %v655 = vsub.f32 %v653, %v654
    %v656 = vand.u32 %v655, 4294901760
    %657 = vmatpush.msra.mxu0 %v656
    %v658 = vand.u32 %v26, 4294901760
    %v659 = vsub.f32 %v26, %v658
    %v660 = vand.u32 %v659, 4294901760
    %v661 = vsub.f32 %v659, %v660
    %v662 = vand.u32 %v661, 4294901760
    %663 = vmatpush.msra.mxu0 %v662
    %v664 = vand.u32 %v25, 4294901760
    %v665 = vsub.f32 %v25, %v664
    %v666 = vand.u32 %v665, 4294901760
    %v667 = vsub.f32 %v665, %v666
    %v668 = vand.u32 %v667, 4294901760
    %669 = vmatpush.msra.mxu0 %v668
    %v670 = vand.u32 %v24, 4294901760
    %v671 = vsub.f32 %v24, %v670
    %v672 = vand.u32 %v671, 4294901760
    %v673 = vsub.f32 %v671, %v672
    %v674 = vand.u32 %v673, 4294901760
    %675 = vmatpush.msra.mxu0 %v674
    %v676 = vand.u32 %v538, 4294901760
    %677 = vmatmul.f32.gmra.mxu0 %v676
    %v678 = vpop.f32.mrf.mxu0
    %v679 = vadd.f32 %v578, %v678
    %680 = vdwg.mxu0
    %v681 = vand.u32 %v39, 4294901760
    %v682 = vsub.f32 %v39, %v681
    %683 = vmatpush.msra.mxu0 %v682
    %v684 = vand.u32 %v38, 4294901760
    %v685 = vsub.f32 %v38, %v684
    %686 = vmatpush.msra.mxu0 %v685
    %v687 = vand.u32 %v37, 4294901760
    %v688 = vsub.f32 %v37, %v687
    %689 = vmatpush.msra.mxu0 %v688
    %v690 = vand.u32 %v36, 4294901760
    %v691 = vsub.f32 %v36, %v690
    %692 = vmatpush.msra.mxu0 %v691
    %v693 = vand.u32 %v35, 4294901760
    %v694 = vsub.f32 %v35, %v693
    %695 = vmatpush.msra.mxu0 %v694
    %v696 = vand.u32 %v34, 4294901760
    %v697 = vsub.f32 %v34, %v696
    %698 = vmatpush.msra.mxu0 %v697
    %v699 = vand.u32 %v33, 4294901760
    %v700 = vsub.f32 %v33, %v699
    %701 = vmatpush.msra.mxu0 %v700
    %v702 = vand.u32 %v32, 4294901760
    %v703 = vsub.f32 %v32, %v702
    %704 = vmatpush.msra.mxu0 %v703
    %v705 = vand.u32 %v31, 4294901760
    %v706 = vsub.f32 %v31, %v705
    %707 = vmatpush.msra.mxu0 %v706
    %v708 = vand.u32 %v30, 4294901760
    %v709 = vsub.f32 %v30, %v708
    %710 = vmatpush.msra.mxu0 %v709
    %v711 = vand.u32 %v29, 4294901760
    %v712 = vsub.f32 %v29, %v711
    %713 = vmatpush.msra.mxu0 %v712
    %v714 = vand.u32 %v28, 4294901760
    %v715 = vsub.f32 %v28, %v714
    %716 = vmatpush.msra.mxu0 %v715
    %v717 = vand.u32 %v27, 4294901760
    %v718 = vsub.f32 %v27, %v717
    %719 = vmatpush.msra.mxu0 %v718
    %v720 = vand.u32 %v26, 4294901760
    %v721 = vsub.f32 %v26, %v720
    %722 = vmatpush.msra.mxu0 %v721
    %v723 = vand.u32 %v25, 4294901760
    %v724 = vsub.f32 %v25, %v723
    %725 = vmatpush.msra.mxu0 %v724
    %v726 = vand.u32 %v24, 4294901760
    %v727 = vsub.f32 %v24, %v726
    %728 = vmatpush.msra.mxu0 %v727
    %v729 = vand.u32 %v538, 4294901760
    %v730 = vsub.f32 %v538, %v729
    %731 = vmatmul.f32.gmra.mxu0 %v730
    %v732 = vpop.f32.mrf.mxu0
    %v733 = vadd.f32 %v679, %v732
    %734 = vdwg.mxu0
    %v735 = vand.u32 %v39, 4294901760
    %736 = vmatpush.msra.mxu0 %v735
    %v737 = vand.u32 %v38, 4294901760
    %738 = vmatpush.msra.mxu0 %v737
    %v739 = vand.u32 %v37, 4294901760
    %740 = vmatpush.msra.mxu0 %v739
    %v741 = vand.u32 %v36, 4294901760
    %742 = vmatpush.msra.mxu0 %v741
    %v743 = vand.u32 %v35, 4294901760
    %744 = vmatpush.msra.mxu0 %v743
    %v745 = vand.u32 %v34, 4294901760
    %746 = vmatpush.msra.mxu0 %v745
    %v747 = vand.u32 %v33, 4294901760
    %748 = vmatpush.msra.mxu0 %v747
    %v749 = vand.u32 %v32, 4294901760
    %750 = vmatpush.msra.mxu0 %v749
    %v751 = vand.u32 %v31, 4294901760
    %752 = vmatpush.msra.mxu0 %v751
    %v753 = vand.u32 %v30, 4294901760
    %754 = vmatpush.msra.mxu0 %v753
    %v755 = vand.u32 %v29, 4294901760
    %756 = vmatpush.msra.mxu0 %v755
    %v757 = vand.u32 %v28, 4294901760
    %758 = vmatpush.msra.mxu0 %v757
    %v759 = vand.u32 %v27, 4294901760
    %760 = vmatpush.msra.mxu0 %v759
    %v761 = vand.u32 %v26, 4294901760
    %762 = vmatpush.msra.mxu0 %v761
    %v763 = vand.u32 %v25, 4294901760
    %764 = vmatpush.msra.mxu0 %v763
    %v765 = vand.u32 %v24, 4294901760
    %766 = vmatpush.msra.mxu0 %v765
    %v767 = vand.u32 %v538, 4294901760
    %v768 = vsub.f32 %v538, %v767
    %v769 = vand.u32 %v768, 4294901760
    %770 = vmatmul.f32.gmra.mxu0 %v769
    %v771 = vpop.f32.mrf.mxu0
    %v772 = vadd.f32 %v733, %v771
    %773 = vdwg.mxu0
    %v774 = vand.u32 %v39, 4294901760
    %v775 = vsub.f32 %v39, %v774
    %v776 = vand.u32 %v775, 4294901760
    %777 = vmatpush.msra.mxu0 %v776
    %v778 = vand.u32 %v38, 4294901760
    %v779 = vsub.f32 %v38, %v778
    %v780 = vand.u32 %v779, 4294901760
    %781 = vmatpush.msra.mxu0 %v780
    %v782 = vand.u32 %v37, 4294901760
    %v783 = vsub.f32 %v37, %v782
    %v784 = vand.u32 %v783, 4294901760
    %785 = vmatpush.msra.mxu0 %v784
    %v786 = vand.u32 %v36, 4294901760
    %v787 = vsub.f32 %v36, %v786
    %v788 = vand.u32 %v787, 4294901760
    %789 = vmatpush.msra.mxu0 %v788
    %v790 = vand.u32 %v35, 4294901760
    %v791 = vsub.f32 %v35, %v790
    %v792 = vand.u32 %v791, 4294901760
    %793 = vmatpush.msra.mxu0 %v792
    %v794 = vand.u32 %v34, 4294901760
    %v795 = vsub.f32 %v34, %v794
    %v796 = vand.u32 %v795, 4294901760
    %797 = vmatpush.msra.mxu0 %v796
    %v798 = vand.u32 %v33, 4294901760
    %v799 = vsub.f32 %v33, %v798
    %v800 = vand.u32 %v799, 4294901760
    %801 = vmatpush.msra.mxu0 %v800
    %v802 = vand.u32 %v32, 4294901760
    %v803 = vsub.f32 %v32, %v802
    %v804 = vand.u32 %v803, 4294901760
    %805 = vmatpush.msra.mxu0 %v804
    %v806 = vand.u32 %v31, 4294901760
    %v807 = vsub.f32 %v31, %v806
    %v808 = vand.u32 %v807, 4294901760
    %809 = vmatpush.msra.mxu0 %v808
    %v810 = vand.u32 %v30, 4294901760
    %v811 = vsub.f32 %v30, %v810
    %v812 = vand.u32 %v811, 4294901760
    %813 = vmatpush.msra.mxu0 %v812
    %v814 = vand.u32 %v29, 4294901760
    %v815 = vsub.f32 %v29, %v814
    %v816 = vand.u32 %v815, 4294901760
    %817 = vmatpush.msra.mxu0 %v816
    %v818 = vand.u32 %v28, 4294901760
    %v819 = vsub.f32 %v28, %v818
    %v820 = vand.u32 %v819, 4294901760
    %821 = vmatpush.msra.mxu0 %v820
    %v822 = vand.u32 %v27, 4294901760
    %v823 = vsub.f32 %v27, %v822
    %v824 = vand.u32 %v823, 4294901760
    %825 = vmatpush.msra.mxu0 %v824
    %v826 = vand.u32 %v26, 4294901760
    %v827 = vsub.f32 %v26, %v826
    %v828 = vand.u32 %v827, 4294901760
    %829 = vmatpush.msra.mxu0 %v828
    %v830 = vand.u32 %v25, 4294901760
    %v831 = vsub.f32 %v25, %v830
    %v832 = vand.u32 %v831, 4294901760
    %833 = vmatpush.msra.mxu0 %v832
    %v834 = vand.u32 %v24, 4294901760
    %v835 = vsub.f32 %v24, %v834
    %v836 = vand.u32 %v835, 4294901760
    %837 = vmatpush.msra.mxu0 %v836
    %v838 = vand.u32 %v538, 4294901760
    %839 = vmatmul.f32.gmra.mxu0 %v838
    %v840 = vpop.f32.mrf.mxu0
    %v841 = vadd.f32 %v772, %v840
    %842 = vdwg.mxu0
    %v843 = vand.u32 %v39, 4294901760
    %844 = vmatpush.msra.mxu0 %v843
    %v845 = vand.u32 %v38, 4294901760
    %846 = vmatpush.msra.mxu0 %v845
    %v847 = vand.u32 %v37, 4294901760
    %848 = vmatpush.msra.mxu0 %v847
    %v849 = vand.u32 %v36, 4294901760
    %850 = vmatpush.msra.mxu0 %v849
    %v851 = vand.u32 %v35, 4294901760
    %852 = vmatpush.msra.mxu0 %v851
    %v853 = vand.u32 %v34, 4294901760
    %854 = vmatpush.msra.mxu0 %v853
    %v855 = vand.u32 %v33, 4294901760
    %856 = vmatpush.msra.mxu0 %v855
    %v857 = vand.u32 %v32, 4294901760
    %858 = vmatpush.msra.mxu0 %v857
    %v859 = vand.u32 %v31, 4294901760
    %860 = vmatpush.msra.mxu0 %v859
    %v861 = vand.u32 %v30, 4294901760
    %862 = vmatpush.msra.mxu0 %v861
    %v863 = vand.u32 %v29, 4294901760
    %864 = vmatpush.msra.mxu0 %v863
    %v865 = vand.u32 %v28, 4294901760
    %866 = vmatpush.msra.mxu0 %v865
    %v867 = vand.u32 %v27, 4294901760
    %868 = vmatpush.msra.mxu0 %v867
    %v869 = vand.u32 %v26, 4294901760
    %870 = vmatpush.msra.mxu0 %v869
    %v871 = vand.u32 %v25, 4294901760
    %872 = vmatpush.msra.mxu0 %v871
    %v873 = vand.u32 %v24, 4294901760
    %874 = vmatpush.msra.mxu0 %v873
    %v875 = vand.u32 %v538, 4294901760
    %876 = vmatmul.f32.gmra.mxu0 %v875
    %v877 = vpop.f32.mrf.mxu0
    %v878 = vadd.f32 %v841, %v877
    %879 = vdwg.mxu0
    %v880 = vmul.f32 %v878, 0.03125
    %v881 = vadd.f32 %v880, 1e-05
    %v882 = vrsqrt.pop %v881
    %v883 = vmul.f32 %v882, %v881
    %v884 = vmul.f32 %v883, %v882
    %v885 = vmul.f32 0.5, %v884
    %v886 = vsub.f32 1.5, %v885
    %v887 = vmul.f32 %v882, %v886
    %vm888 = vweird.f32 %v881
    %vm889 = vweird.f32 %v882
    %vm890 = vmor %vm888, %vm889
    %v891 = vsel %vm890, %v882, %v887
    %v893 = vsel %vm383, %v891, 0
    %895 = vmatpush.msra.mxu0 0.0
    %896 = vmatpush.msra.mxu0 0.0
    %897 = vmatpush.msra.mxu0 0.0
    %898 = vmatpush.msra.mxu0 0.0
    %899 = vmatpush.msra.mxu0 0.0
    %900 = vmatpush.msra.mxu0 0.0
    %901 = vmatpush.msra.mxu0 0.0
    %902 = vmatpush.msra.mxu0 0.0
    %903 = vmatpush.msra.mxu0 0.0
    %904 = vmatpush.msra.mxu0 0.0
    %905 = vmatpush.msra.mxu0 0.0
    %906 = vmatpush.msra.mxu0 0.0
    %907 = vmatpush.msra.mxu0 0.0
    %908 = vmatpush.msra.mxu0 0.0
    %909 = vmatpush.msra.mxu0 0.0
    %v910 = vand.u32 %v389, 4294901760
    %911 = vmatpush.msra.mxu0 %v910
    %v912 = vand.u32 %v893, 4294901760
    %v913 = vsub.f32 %v893, %v912
    %v914 = vand.u32 %v913, 4294901760
    %v915 = vsub.f32 %v913, %v914
    %v916 = vand.u32 %v915, 4294901760
    %917 = vmatmul.f32.gmra.mxu0 %v916
    %v918 = vpop.f32.mrf.mxu0
    %v919 = vadd.f32 0.0, %v918
    %920 = vdwg.mxu0
    %921 = vmatpush.msra.mxu0 0.0
    %922 = vmatpush.msra.mxu0 0.0
    %923 = vmatpush.msra.mxu0 0.0
    %924 = vmatpush.msra.mxu0 0.0
    %925 = vmatpush.msra.mxu0 0.0
    %926 = vmatpush.msra.mxu0 0.0
    %927 = vmatpush.msra.mxu0 0.0
    %928 = vmatpush.msra.mxu0 0.0
    %929 = vmatpush.msra.mxu0 0.0
    %930 = vmatpush.msra.mxu0 0.0
    %931 = vmatpush.msra.mxu0 0.0
    %932 = vmatpush.msra.mxu0 0.0
    %933 = vmatpush.msra.mxu0 0.0
    %934 = vmatpush.msra.mxu0 0.0
    %935 = vmatpush.msra.mxu0 0.0
    %v936 = vand.u32 %v389, 4294901760
    %v937 = vsub.f32 %v389, %v936
    %v938 = vand.u32 %v937, 4294901760
    %v939 = vsub.f32 %v937, %v938
    %v940 = vand.u32 %v939, 4294901760
    %941 = vmatpush.msra.mxu0 %v940
    %v942 = vand.u32 %v893, 4294901760
    %943 = vmatmul.f32.gmra.mxu0 %v942
    %v944 = vpop.f32.mrf.mxu0
    %v945 = vadd.f32 %v919, %v944
    %946 = vdwg.mxu0
    %947 = vmatpush.msra.mxu0 0.0
    %948 = vmatpush.msra.mxu0 0.0
    %949 = vmatpush.msra.mxu0 0.0
    %950 = vmatpush.msra.mxu0 0.0
    %951 = vmatpush.msra.mxu0 0.0
    %952 = vmatpush.msra.mxu0 0.0
    %953 = vmatpush.msra.mxu0 0.0
    %954 = vmatpush.msra.mxu0 0.0
    %955 = vmatpush.msra.mxu0 0.0
    %956 = vmatpush.msra.mxu0 0.0
    %957 = vmatpush.msra.mxu0 0.0
    %958 = vmatpush.msra.mxu0 0.0
    %959 = vmatpush.msra.mxu0 0.0
    %960 = vmatpush.msra.mxu0 0.0
    %961 = vmatpush.msra.mxu0 0.0
    %v962 = vand.u32 %v389, 4294901760
    %v963 = vsub.f32 %v389, %v962
    %964 = vmatpush.msra.mxu0 %v963
    %v965 = vand.u32 %v893, 4294901760
    %v966 = vsub.f32 %v893, %v965
    %967 = vmatmul.f32.gmra.mxu0 %v966
    %v968 = vpop.f32.mrf.mxu0
    %v969 = vadd.f32 %v945, %v968
    %970 = vdwg.mxu0
    %971 = vmatpush.msra.mxu0 0.0
    %972 = vmatpush.msra.mxu0 0.0
    %973 = vmatpush.msra.mxu0 0.0
    %974 = vmatpush.msra.mxu0 0.0
    %975 = vmatpush.msra.mxu0 0.0
    %976 = vmatpush.msra.mxu0 0.0
    %977 = vmatpush.msra.mxu0 0.0
    %978 = vmatpush.msra.mxu0 0.0
    %979 = vmatpush.msra.mxu0 0.0
    %980 = vmatpush.msra.mxu0 0.0
    %981 = vmatpush.msra.mxu0 0.0
    %982 = vmatpush.msra.mxu0 0.0
    %983 = vmatpush.msra.mxu0 0.0
    %984 = vmatpush.msra.mxu0 0.0
    %985 = vmatpush.msra.mxu0 0.0
    %v986 = vand.u32 %v389, 4294901760
    %987 = vmatpush.msra.mxu0 %v986
    %v988 = vand.u32 %v893, 4294901760
    %v989 = vsub.f32 %v893, %v988
    %v990 = vand.u32 %v989, 4294901760
    %991 = vmatmul.f32.gmra.mxu0 %v990
    %v992 = vpop.f32.mrf.mxu0
    %v993 = vadd.f32 %v969, %v992
    %994 = vdwg.mxu0
    %995 = vmatpush.msra.mxu0 0.0
    %996 = vmatpush.msra.mxu0 0.0
    %997 = vmatpush.msra.mxu0 0.0
    %998 = vmatpush.msra.mxu0 0.0
    %999 = vmatpush.msra.mxu0 0.0
    %1000 = vmatpush.msra.mxu0 0.0
    %1001 = vmatpush.msra.mxu0 0.0
    %1002 = vmatpush.msra.mxu0 0.0
    %1003 = vmatpush.msra.mxu0 0.0
    %1004 = vmatpush.msra.mxu0 0.0
    %1005 = vmatpush.msra.mxu0 0.0
    %1006 = vmatpush.msra.mxu0 0.0
    %1007 = vmatpush.msra.mxu0 0.0
    %1008 = vmatpush.msra.mxu0 0.0
    %1009 = vmatpush.msra.mxu0 0.0
    %v1010 = vand.u32 %v389, 4294901760
    %v1011 = vsub.f32 %v389, %v1010
    %v1012 = vand.u32 %v1011, 4294901760
    %1013 = vmatpush.msra.mxu0 %v1012
    %v1014 = vand.u32 %v893, 4294901760
    %1015 = vmatmul.f32.gmra.mxu0 %v1014
    %v1016 = vpop.f32.mrf.mxu0
    %v1017 = vadd.f32 %v993, %v1016
    %1018 = vdwg.mxu0
    %1019 = vmatpush.msra.mxu0 0.0
    %1020 = vmatpush.msra.mxu0 0.0
    %1021 = vmatpush.msra.mxu0 0.0
    %1022 = vmatpush.msra.mxu0 0.0
    %1023 = vmatpush.msra.mxu0 0.0
    %1024 = vmatpush.msra.mxu0 0.0
    %1025 = vmatpush.msra.mxu0 0.0
    %1026 = vmatpush.msra.mxu0 0.0
    %1027 = vmatpush.msra.mxu0 0.0
    %1028 = vmatpush.msra.mxu0 0.0
    %1029 = vmatpush.msra.mxu0 0.0
    %1030 = vmatpush.msra.mxu0 0.0
    %1031 = vmatpush.msra.mxu0 0.0
    %1032 = vmatpush.msra.mxu0 0.0
    %1033 = vmatpush.msra.mxu0 0.0
    %v1034 = vand.u32 %v389, 4294901760
    %1035 = vmatpush.msra.mxu0 %v1034
    %v1036 = vand.u32 %v893, 4294901760
    %1037 = vmatmul.f32.gmra.mxu0 %v1036
    %v1038 = vpop.f32.mrf.mxu0
    %v1039 = vadd.f32 %v1017, %v1038
    %1040 = vdwg.mxu0
    %v1041 = vmul.f32 %v537, %v1039
    %v1043 = vperm.slane %v22, 0
    %v1045 = vmul.f32 %v1041, %v1043
    %v1047 = vperm.slane %v23, 0
    %v1049 = vadd.f32 %v1045, %v1047
    %1050 = vst [vmem:[#allocation2] sm:$0xff] %v1049
    // Predicated region
    $region22: #{tpu_custom_call.1} parent=1 // pred_check
      _
    $region23: #{tpu_custom_call.1} parent=1 // pred_check_branch
      %1052 = sbr.rel (0) target = $region25
    $region24: #{tpu_custom_call.1} parent=1 // pred_region
      %1054 = vsyncadd [#allocation3], 64
      %s1055 = sshll.u32 [#allocation2], 4
      %s1056 = int_to_ptr.vmem [resolvable:$true] %s1055
      %s1057 = sshll.u32 %s5, 4
      %s1058 = int_to_ptr.hbm [resolvable:$true] %s1057
      %1063 = dma.vmem_to_hbm [thread:$0]  %s1056, 64, %s1058, [#allocation3], 64, 64, 4
    $region25: #{tpu_custom_call.1} parent=1 // pred_fallthru
      _
    // Predicated region
    $region26: #{tpu_custom_call.1} parent=1 // pred_check
      _
    $region27: #{tpu_custom_call.1} parent=1 // pred_check_branch
      %1065 = sbr.rel (0) target = $region29
    $region28: #{tpu_custom_call.1} parent=1 // pred_region
      %1067 = dma.done [#allocation3], 128
    $region29: #{tpu_custom_call.1} parent=1 // pred_fallthru
      _
    %1068 = vsyncpa [#allocation3], 1

</llo_original>
